<compile_context>
chip_gen: v6e
topology: v6e:2x2x1
jax: 0.10.0
libtpu: 0.0.40
codegen_flags: <defaults>
</compile_context>

<pallas_src>
import math

import jax
import jax.numpy as jnp
from jax.experimental import pallas as pl
from jax.experimental.pallas import tpu as pltpu


# ----------------------------------------------------------------------------
# Kernels
# ----------------------------------------------------------------------------
def _dma_flat_kernel(x_hbm, o_hbm):
    """Single HBM->HBM copy: no VMEM staging, no pipeline, one DMA."""
    def body(sem):
        cp = pltpu.make_async_copy(x_hbm, o_hbm, sem)
        cp.start()
        cp.wait()
    pl.run_scoped(body, pltpu.SemaphoreType.DMA)


def _tile_copy_kernel(x_ref, o_ref):
    """Lane-dense tile copy (fusion anchor: per-tile compute would go here)."""
    o_ref[...] = x_ref[...]


# ----------------------------------------------------------------------------
# Helpers
# ----------------------------------------------------------------------------
def _sublane_count(dtype):
    """Min sublane multiple for full packed vregs (dtype-aware rounding)."""
    return {4: 8, 2: 16, 1: 32}.get(jnp.dtype(dtype).itemsize, 8)


def _budgets():
    """(per-block byte budget, vmem_limit_bytes) gated on physical VMEM."""
    try:
        vmem_phys = int(pltpu.get_tpu_info().vmem_capacity_bytes)
    except Exception:
        vmem_phys = 64 << 20  # conservative (v7x-sized) fallback
    if vmem_phys >= (96 << 20):          # v5e / v6e: 128 MiB physical
        return 4 << 20, 48 << 20
    return 4 << 20, 40 << 20             # v7x: 64 MiB physical


def _pick_slab(total, sublane, max_cols=8192):
    """Reshape `total` elements into a squarish (R, k*128) slab.

    Returns None if `total` is not a multiple of 128 (caller falls back to the
    natural (n, flat_dim) view).
    """
    if total % 128 != 0:
        return None
    best_c = None
    k = 1
    while k * 128 <= min(max_cols, total):
        c = k * 128
        if total % c == 0:
            r = total // c
            if r >= sublane:
                best_c = c            # keep the largest C that still gives full rows
            elif best_c is None:
                best_c = c            # tiny arrays: at least lane-dense
        k += 1
    if best_c is None:
        return None
    return total // best_c, best_c


# ----------------------------------------------------------------------------
# Wrappers
# ----------------------------------------------------------------------------
def flat(x, use_kernel=False, tiled=False):
    """Pallas equivalent of torch `x.view(x.size(0), -1)`.

    Default path is the free, metadata-only reshape (feedback #1).  Set
    `use_kernel=True` to route through a Pallas kernel (DMA copy by default,
    or the tiled fusion-ready copy with `tiled=True`).
    """
    n = x.shape[0]
    flat_dim = int(math.prod(x.shape[1:])) if x.ndim > 1 else 1
    if not use_kernel:
        return jnp.reshape(x, (n, flat_dim))
    return flat_pallas_tiled(x) if tiled else flat_pallas_dma(x)


def flat_pallas_dma(x):
    """Flatten via a single HBM->HBM DMA (no VMEM staging, no grid)."""
    n = x.shape[0]
    flat_dim = int(math.prod(x.shape[1:])) if x.ndim > 1 else 1
    itemsize = jnp.dtype(x.dtype).itemsize
    x2 = jnp.reshape(x, (n, flat_dim))            # metadata-only
    return pl.pallas_call(
        _dma_flat_kernel,
        out_shape=jax.ShapeDtypeStruct((n, flat_dim), x.dtype),
        in_specs=[pl.BlockSpec(memory_space=pl.ANY)],
        out_specs=pl.BlockSpec(memory_space=pl.ANY),
        cost_estimate=pl.CostEstimate(
            flops=0, transcendentals=0,
            bytes_accessed=2 * n * flat_dim * itemsize),
    )(x2)


def flat_pallas_tiled(x):
    """Flatten via a tiled, pipelined VMEM copy (kept as a fusion anchor)."""
    n = x.shape[0]
    flat_dim = int(math.prod(x.shape[1:])) if x.ndim > 1 else 1
    total = n * flat_dim
    itemsize = jnp.dtype(x.dtype).itemsize
    sub = _sublane_count(x.dtype)
    block_bytes, vmem_limit = _budgets()

    # --- copy geometry decoupled from (n, flat_dim) -------------------------
    slab = _pick_slab(total, sub)
    if slab is None:
        slab = (n, flat_dim)                       # odd sizes: natural 2-D view
    R, C = slab
    x2 = jnp.reshape(x, (R, C))                    # metadata-only

    # Column tile: full width, or a large multiple of 128 (lane dense).
    bc = min(C, 8192) if C % 128 == 0 else C
    # Row tile: dtype-aware sublane multiple sized to the per-block budget.
    rows_budget = max(sub, block_bytes // (bc * itemsize))
    rows_budget = max(sub, (rows_budget // sub) * sub)
    br = R if R <= rows_budget else rows_budget

    grid = (pl.cdiv(R, br), pl.cdiv(C, bc))
    # v7x (2 TCs): if everything landed in one block, split the column axis so
    # both cores get work (only worth it for non-trivial sizes).
    if grid == (1, 1) and total * itemsize >= (1 << 20) and C % 256 == 0:
        bc = C // 2
        grid = (pl.cdiv(R, br), pl.cdiv(C, bc))

    out = pl.pallas_call(
        _tile_copy_kernel,
        out_shape=jax.ShapeDtypeStruct((R, C), x.dtype),
        grid=grid,
        in_specs=[pl.BlockSpec((br, bc), lambda i, j: (i, j))],
        out_specs=pl.BlockSpec((br, bc), lambda i, j: (i, j)),
        compiler_params=pltpu.CompilerParams(
            dimension_semantics=("parallel", "parallel"),
            vmem_limit_bytes=vmem_limit,
        ),
        cost_estimate=pl.CostEstimate(
            flops=0, transcendentals=0,
            bytes_accessed=2 * total * itemsize),
    )(x2)
    return jnp.reshape(out, (n, flat_dim))         # metadata-only


# ----------------------------------------------------------------------------
# Self-test
# ----------------------------------------------------------------------------
if __name__ == "__main__":
    key = jax.random.PRNGKey(0)

    # NCHW input consistent with the module (batch=2, channels=4, 16x16).
    x = jax.random.normal(key, (2, 4, 16, 16), dtype=jnp.float32)
    ref = x.reshape(x.shape[0], -1)

    # 1) Production fast path (metadata-only reshape).
    out_fast = jax.block_until_ready(flat(x))
    assert out_fast.shape == (2, 4 * 16 * 16) and out_fast.dtype == x.dtype
    assert jnp.array_equal(out_fast, ref)

    # 2) Single HBM->HBM DMA kernel.
    out_dma = jax.block_until_ready(flat(x, use_kernel=True))
    assert out_dma.shape == ref.shape and jnp.array_equal(out_dma, ref)

    # 3) Tiled (fusion-ready) kernel, f32.
    out_tiled = jax.block_until_ready(flat(x, use_kernel=True, tiled=True))
    assert out_tiled.shape == ref.shape and jnp.array_equal(out_tiled, ref)

    # 4) Tiled kernel with a packed dtype (exercises dtype-aware sublane tiles)
    #    and a slightly larger feature map (exercises the slab reshape).
    xb = jax.random.normal(jax.random.PRNGKey(1), (4, 8, 32, 32),
                           dtype=jnp.bfloat16)
    refb = xb.reshape(xb.shape[0], -1)
    outb = jax.block_until_ready(flat(xb, use_kernel=True, tiled=True))
    assert outb.shape == refb.shape and outb.dtype == xb.dtype
    assert jnp.array_equal(outb, refb)

    print("KERNEL_OK")
</pallas_src>

<mosaic_0001>
module attributes {stable_mosaic.version = 11 : i64} {
  func.func @_dma_flat_kernel(%arg0: memref<2x1024xf32, #tpu.memory_space<any>>, %arg1: memref<2x1024xf32, #tpu.memory_space<any>>) attributes {dimension_semantics = [], scalar_prefetch = 0 : i64, scratch_operands = 0 : i64, tpu.core_type = #tpu.core_type<tc>} {
    "tpu.region"() ({
      %0 = tpu.sem_alloc : memref<!tpu.dma_semaphore, #tpu.memory_space<semaphore_mem>>
      tpu.enqueue_dma source(%arg0 : memref<2x1024xf32, #tpu.memory_space<any>>) target(%arg1 : memref<2x1024xf32, #tpu.memory_space<any>>) target_semaphore(%0 : memref<!tpu.dma_semaphore, #tpu.memory_space<semaphore_mem>>)
      tpu.wait_dma2 semaphore(%0 : memref<!tpu.dma_semaphore, #tpu.memory_space<semaphore_mem>>) src(%arg0 : memref<2x1024xf32, #tpu.memory_space<any>>) dst(%arg1 : memref<2x1024xf32, #tpu.memory_space<any>>)
      tpu.yield
    }) : () -> ()
    return
  }
}

</mosaic_0001>

<llo_original>
// kernel: tpu_custom_call.1
$region0: #{tpu_custom_call.1}
  #allocation0 [shape = 'u32[]', space=smem, size = 0x4, offset = 0x4, fixed_abs, tag = 'smem constant byte address 0x4 - core index']
  #allocation1 [shape = 'u32[144,128]{1,0:T(1,128)}', space=vmem, size = 0x12000, scoped, tag = 'internal scratch']
  #allocation3 [shape = 's32[]', space=sflag, size = 0x4, offset = 0, fixed_abs, tag = 'sflag constant byte address 0x0 - dummy sync flag']
  #allocation4 [shape = 'u32[0]{0}', space=smem, size = 0, offset = 0, fixed_abs, tag = 'smem constant byte address 0x0 - null']
  %s0 = inlined_call_operand.hbm [shape: f32[2,1024], index: 0, kind: input, shape index: {}]
  %s1 = inlined_call_operand.hbm [shape: f32[2,1024], index: 1, kind: output, shape index: {}]
  %s2 = sld [smem:[#allocation0]]
  $region3: #{tpu_custom_call.1} parent=0
    _
  %s4 = ssub.s32 1, %s2
  %s5 = scalar_select 0, %s4, %s2
  $region2: #{tpu_custom_call.1} parent=0
    #allocation2 [shape = 's32[1]{0}', space=sflag, size = 0x4, scoped, tag = 'scoped memory for tpu_custom_call.1']
    %s7 = sshll.u32 1, 14
    %s8 = sxor.u32 4294967295, %s7
    %12 = dma.general %s0, 256, %s1, [#allocation2], 131072, [#allocation4], 0, 0
    %s13 = smul.u32 2, 1
    %s14 = smul.u32 %s13, 8
    %s15 = sshll.u32 %s14, 4
    %16 = dma.done [#allocation2], %s15

</llo_original>
